<compile_context>
chip_gen: v5e
topology: v5e:2x2
jax: 0.10.0
libtpu: 0.0.40
codegen_flags: <defaults>
</compile_context>

<pallas_src>
import functools

import jax
import jax.numpy as jnp
from jax.experimental import pallas as pl
from jax.experimental.pallas import tpu as pltpu

BN_EPS = 1e-5


# ---------------------------------------------------------------------------
# Fused kernel: [Linear -> BN(batch stats) -> ReLU] * num_hidden -> Linear
# ---------------------------------------------------------------------------
def _make_fused_kernel(num_hidden, inv_batch):
    """num_hidden is static; inv_batch = 1/B as a python float."""

    def kernel(*refs):
        # refs = [x, w_0 .. w_{L-1}, w_out, vecs, o_ref]
        x_ref = refs[0]
        o_ref = refs[-1]
        vecs = refs[-2][...]          # (2L+1, max_w): gamma_i, beta_i, ..., b_out
        w_refs = refs[1:-2]

        h = x_ref[...]                # (B, in_size) f32
        for i in range(num_hidden):
            w = w_refs[i][...]        # (in, hs)
            hs = w.shape[1]
            # Hidden bias omitted: cancels exactly under batch-stat BN.
            y = jnp.dot(h, w, preferred_element_type=jnp.float32)      # (B, hs)

            # BatchNorm1d training-mode stats in one pass, f32, biased var
            # (clamped at 0 against rounding), eps = 1e-5.  axis=0 reductions
            # land on the XLU (idle otherwise) - leave them there.
            mean = jnp.sum(y, axis=0, keepdims=True) * inv_batch        # (1, hs)
            var = jnp.sum(y * y, axis=0, keepdims=True) * inv_batch - mean * mean
            var = jnp.maximum(var, 0.0)

            gamma = vecs[2 * i, :hs]                                    # (hs,)
            beta = vecs[2 * i + 1, :hs]                                 # (hs,)

            # Fold BN into one scale/shift, fuse ReLU.
            s = gamma * jax.lax.rsqrt(var + BN_EPS)                     # (1, hs)
            t = beta - mean * s
            h = jnp.maximum(y * s + t, 0.0)

        w_out = w_refs[num_hidden][...]                                 # (in, out)
        b_out = vecs[2 * num_hidden, :o_ref.shape[1]]                   # (out,)
        o_ref[...] = jnp.dot(h, w_out, preferred_element_type=jnp.float32) + b_out

    return kernel


def fused_forward(x2d, weights, vecs):
    """x2d: (B, n_ch*n_ch) f32; weights: tuple of (in,out) f32; vecs: (2L+1, max_w)."""
    B = x2d.shape[0]
    num_hidden = len(weights) - 1
    out_size = weights[-1].shape[1]

    inputs = (x2d,) + tuple(weights) + (vecs,)
    vmem = pl.BlockSpec(memory_space=pltpu.MemorySpace.VMEM)  # full-array block

    # Advisory cost estimate for the XLA scheduler.
    flops = sum(2 * B * w.shape[0] * w.shape[1] for w in weights)
    transcendentals = sum(w.shape[1] for w in weights[:-1])   # one rsqrt/feature
    bytes_accessed = (sum(int(a.size) * a.dtype.itemsize for a in inputs)
                      + B * out_size * 4)
    cost = pl.CostEstimate(flops=flops, transcendentals=transcendentals,
                           bytes_accessed=bytes_accessed)

    # Scoped-VMEM budget: params + a few live activation slabs, x2 headroom,
    # clamped to stay within v7x's 64 MiB physical VMEM.
    max_w = max(w.shape[1] for w in weights)
    act_bytes = B * (x2d.shape[1] + 3 * max_w) * 4
    param_bytes = sum(int(a.size) * a.dtype.itemsize for a in inputs[1:])
    vmem_bytes = int(min(64 * 1024 * 1024,
                         max(16 * 1024 * 1024,
                             2 * (act_bytes + param_bytes) + (1 << 20))))

    kernel = _make_fused_kernel(num_hidden, 1.0 / B)
    return pl.pallas_call(
        kernel,
        out_shape=jax.ShapeDtypeStruct((B, out_size), jnp.float32),
        in_specs=[vmem] * len(inputs),
        out_specs=vmem,
        compiler_params=pltpu.CompilerParams(vmem_limit_bytes=vmem_bytes),
        cost_estimate=cost,
    )(*inputs)


# ---------------------------------------------------------------------------
# Parameter init (deterministic, mimics PyTorch defaults) + kernel packing
# ---------------------------------------------------------------------------
def init_params(key, n_ch, n_features, hidden_sizes):
    """PyTorch-style params; weights stored transposed: (in_features, out_features)."""
    params = []
    in_size = n_ch * n_ch
    for hs in hidden_sizes:
        key, kw, kb = jax.random.split(key, 3)
        bound = float(in_size) ** -0.5
        w = jax.random.uniform(kw, (in_size, hs), jnp.float32, -bound, bound)
        b = jax.random.uniform(kb, (1, hs), jnp.float32, -bound, bound)
        gamma = jnp.ones((1, hs), jnp.float32)     # BatchNorm1d weight init
        beta = jnp.zeros((1, hs), jnp.float32)     # BatchNorm1d bias init
        params.append((w, b, gamma, beta))
        in_size = hs
    out_size = n_ch * n_features
    key, kw, kb = jax.random.split(key, 3)
    bound = float(in_size) ** -0.5
    w = jax.random.uniform(kw, (in_size, out_size), jnp.float32, -bound, bound)
    b = jax.random.uniform(kb, (1, out_size), jnp.float32, -bound, bound)
    params.append((w, b))
    return params


def pack_kernel_params(params):
    """-> (weights tuple, vecs (2L+1, max_w)).  Hidden biases dropped (cancel in BN)."""
    hidden = params[:-1]
    w_out, b_out = params[-1]
    weights = tuple(w for (w, _, _, _) in hidden) + (w_out,)
    max_w = max([w.shape[1] for w in weights])
    rows = []
    for (_, _, g, be) in hidden:
        rows.append(jnp.zeros((max_w,), jnp.float32).at[:g.shape[1]].set(g[0]))
        rows.append(jnp.zeros((max_w,), jnp.float32).at[:be.shape[1]].set(be[0]))
    rows.append(jnp.zeros((max_w,), jnp.float32).at[:b_out.shape[1]].set(b_out[0]))
    vecs = jnp.stack(rows)                         # (2L+1, max_w)
    return weights, vecs


# ---------------------------------------------------------------------------
# Forward pass (reshape glue in JAX; the whole network runs in one Pallas call)
# ---------------------------------------------------------------------------
@functools.partial(jax.jit, static_argnames=("n_ch", "n_features"))
def custom_fully_connected(x, weights, vecs, *, n_ch, n_features):
    B = x.shape[0]
    h = x.reshape(B, -1).astype(jnp.float32)       # x.view(B, -1), no padding
    out = fused_forward(h, weights, vecs)          # (B, n_ch*n_features)
    return out.reshape(B, n_ch, n_features)        # x.view(B, n_ch, n_features)
    # TODO(synk): Dropout not implemented (module default dropout=None);
    #             BatchNorm running_mean/running_var (eval mode) not tracked.


# ---------------------------------------------------------------------------
# Pure-JAX reference: full PyTorch training-mode semantics (incl. hidden bias)
# ---------------------------------------------------------------------------
def reference_forward(x, params, n_ch, n_features):
    B = x.shape[0]
    h = x.reshape(B, -1).astype(jnp.float32)
    for (w, b, g, be) in params[:-1]:
        y = h @ w + b
        mean = jnp.mean(y, axis=0, keepdims=True)
        var = jnp.mean((y - mean) ** 2, axis=0, keepdims=True)   # biased
        yh = (y - mean) / jnp.sqrt(var + BN_EPS)
        h = jnp.maximum(yh * g + be, 0.0)
    w, b = params[-1]
    y = h @ w + b
    return y.reshape(B, n_ch, n_features)


if __name__ == "__main__":
    # Module input is (B, n_ch, n_ch); B > 1 required for BatchNorm statistics.
    B, n_ch, n_features = 8, 4, 8
    hidden_sizes = [32, 32]

    key = jax.random.PRNGKey(0)
    key, kx = jax.random.split(key)
    x = jax.random.normal(kx, (B, n_ch, n_ch), jnp.float32)

    params = init_params(key, n_ch, n_features, hidden_sizes)
    weights, vecs = pack_kernel_params(params)

    out = custom_fully_connected(x, weights, vecs, n_ch=n_ch, n_features=n_features)
    out = jax.block_until_ready(out)

    assert out.shape == (B, n_ch, n_features), out.shape
    assert jnp.all(jnp.isfinite(out))

    ref = reference_forward(x, params, n_ch, n_features)
    assert jnp.allclose(out, ref, rtol=1e-3, atol=1e-3), (
        float(jnp.max(jnp.abs(out - ref))))

    print("KERNEL_OK")
</pallas_src>

<mosaic_0001>
module attributes {stable_mosaic.version = 11 : i64} {
  func.func @kernel(%arg0: memref<8x16xf32, #tpu.memory_space<vmem>>, %arg1: memref<16x32xf32, #tpu.memory_space<vmem>>, %arg2: memref<32x32xf32, #tpu.memory_space<vmem>>, %arg3: memref<32x32xf32, #tpu.memory_space<vmem>>, %arg4: memref<5x32xf32, #tpu.memory_space<vmem>>, %arg5: memref<8x32xf32, #tpu.memory_space<vmem>>) attributes {dimension_semantics = [], scalar_prefetch = 0 : i64, scratch_operands = 0 : i64, tpu.core_type = #tpu.core_type<tc>} {
    %c0 = arith.constant 0 : index
    %c0_0 = arith.constant 0 : index
    %0 = vector.load %arg4[%c0, %c0_0] : memref<5x32xf32, #tpu.memory_space<vmem>>, vector<5x32xf32>
    %c0_1 = arith.constant 0 : index
    %c0_2 = arith.constant 0 : index
    %1 = vector.load %arg0[%c0_1, %c0_2] : memref<8x16xf32, #tpu.memory_space<vmem>>, vector<8x16xf32>
    %c0_3 = arith.constant 0 : index
    %c0_4 = arith.constant 0 : index
    %2 = vector.load %arg1[%c0_3, %c0_4] : memref<16x32xf32, #tpu.memory_space<vmem>>, vector<16x32xf32>
    %cst = arith.constant dense<0.000000e+00> : vector<8x32xf32>
    %3 = tpu.matmul %1, %2, %cst {dimension_numbers = #tpu.dot_dimension_numbers<[1], [0], [0], [1], [0, 0, 1, 1], [], []>} : vector<8x16xf32>, vector<16x32xf32>, vector<8x32xf32> -> vector<8x32xf32>
    %cst_5 = arith.constant dense<0.000000e+00> : vector<32xf32>
    %4 = vector.multi_reduction <add>, %3, %cst_5 [0] : vector<8x32xf32> to vector<32xf32>
    %5 = vector.shape_cast %4 : vector<32xf32> to vector<1x32xf32>
    %cst_6 = arith.constant 1.250000e-01 : f32
    %6 = vector.broadcast %cst_6 : f32 to vector<1x32xf32>
    %7 = arith.mulf %5, %6 : vector<1x32xf32>
    %8 = arith.mulf %3, %3 : vector<8x32xf32>
    %cst_7 = arith.constant dense<0.000000e+00> : vector<32xf32>
    %9 = vector.multi_reduction <add>, %8, %cst_7 [0] : vector<8x32xf32> to vector<32xf32>
    %10 = vector.shape_cast %9 : vector<32xf32> to vector<1x32xf32>
    %cst_8 = arith.constant 1.250000e-01 : f32
    %11 = vector.broadcast %cst_8 : f32 to vector<1x32xf32>
    %12 = arith.mulf %10, %11 : vector<1x32xf32>
    %13 = arith.mulf %7, %7 : vector<1x32xf32>
    %14 = arith.subf %12, %13 : vector<1x32xf32>
    %cst_9 = arith.constant 0.000000e+00 : f32
    %15 = vector.broadcast %cst_9 : f32 to vector<1x32xf32>
    %16 = arith.maximumf %14, %15 : vector<1x32xf32>
    %17 = vector.extract_strided_slice %0 {offsets = [0, 0], sizes = [1, 32], strides = [1, 1]} : vector<5x32xf32> to vector<1x32xf32>
    %18 = vector.shape_cast %17 : vector<1x32xf32> to vector<32xf32>
    %19 = vector.extract_strided_slice %0 {offsets = [1, 0], sizes = [1, 32], strides = [1, 1]} : vector<5x32xf32> to vector<1x32xf32>
    %20 = vector.shape_cast %19 : vector<1x32xf32> to vector<32xf32>
    %cst_10 = arith.constant 9.99999974E-6 : f32
    %21 = vector.broadcast %cst_10 : f32 to vector<1x32xf32>
    %22 = arith.addf %16, %21 : vector<1x32xf32>
    %23 = math.rsqrt %22 : vector<1x32xf32>
    %24 = vector.shape_cast %18 : vector<32xf32> to vector<1x32xf32>
    %25 = arith.mulf %24, %23 : vector<1x32xf32>
    %26 = arith.mulf %7, %25 : vector<1x32xf32>
    %27 = vector.shape_cast %20 : vector<32xf32> to vector<1x32xf32>
    %28 = arith.subf %27, %26 : vector<1x32xf32>
    %29 = vector.broadcast %25 : vector<1x32xf32> to vector<8x32xf32>
    %30 = arith.mulf %3, %29 : vector<8x32xf32>
    %31 = vector.broadcast %28 : vector<1x32xf32> to vector<8x32xf32>
    %32 = arith.addf %30, %31 : vector<8x32xf32>
    %cst_11 = arith.constant 0.000000e+00 : f32
    %33 = vector.broadcast %cst_11 : f32 to vector<8x32xf32>
    %34 = arith.maximumf %32, %33 : vector<8x32xf32>
    %c0_12 = arith.constant 0 : index
    %c0_13 = arith.constant 0 : index
    %35 = vector.load %arg2[%c0_12, %c0_13] : memref<32x32xf32, #tpu.memory_space<vmem>>, vector<32x32xf32>
    %cst_14 = arith.constant dense<0.000000e+00> : vector<8x32xf32>
    %36 = tpu.matmul %34, %35, %cst_14 {dimension_numbers = #tpu.dot_dimension_numbers<[1], [0], [0], [1], [0, 0, 1, 1], [], []>} : vector<8x32xf32>, vector<32x32xf32>, vector<8x32xf32> -> vector<8x32xf32>
    %cst_15 = arith.constant dense<0.000000e+00> : vector<32xf32>
    %37 = vector.multi_reduction <add>, %36, %cst_15 [0] : vector<8x32xf32> to vector<32xf32>
    %38 = vector.shape_cast %37 : vector<32xf32> to vector<1x32xf32>
    %cst_16 = arith.constant 1.250000e-01 : f32
    %39 = vector.broadcast %cst_16 : f32 to vector<1x32xf32>
    %40 = arith.mulf %38, %39 : vector<1x32xf32>
    %41 = arith.mulf %36, %36 : vector<8x32xf32>
    %cst_17 = arith.constant dense<0.000000e+00> : vector<32xf32>
    %42 = vector.multi_reduction <add>, %41, %cst_17 [0] : vector<8x32xf32> to vector<32xf32>
    %43 = vector.shape_cast %42 : vector<32xf32> to vector<1x32xf32>
    %cst_18 = arith.constant 1.250000e-01 : f32
    %44 = vector.broadcast %cst_18 : f32 to vector<1x32xf32>
    %45 = arith.mulf %43, %44 : vector<1x32xf32>
    %46 = arith.mulf %40, %40 : vector<1x32xf32>
    %47 = arith.subf %45, %46 : vector<1x32xf32>
    %cst_19 = arith.constant 0.000000e+00 : f32
    %48 = vector.broadcast %cst_19 : f32 to vector<1x32xf32>
    %49 = arith.maximumf %47, %48 : vector<1x32xf32>
    %50 = vector.extract_strided_slice %0 {offsets = [2, 0], sizes = [1, 32], strides = [1, 1]} : vector<5x32xf32> to vector<1x32xf32>
    %51 = vector.shape_cast %50 : vector<1x32xf32> to vector<32xf32>
    %52 = vector.extract_strided_slice %0 {offsets = [3, 0], sizes = [1, 32], strides = [1, 1]} : vector<5x32xf32> to vector<1x32xf32>
    %53 = vector.shape_cast %52 : vector<1x32xf32> to vector<32xf32>
    %cst_20 = arith.constant 9.99999974E-6 : f32
    %54 = vector.broadcast %cst_20 : f32 to vector<1x32xf32>
    %55 = arith.addf %49, %54 : vector<1x32xf32>
    %56 = math.rsqrt %55 : vector<1x32xf32>
    %57 = vector.shape_cast %51 : vector<32xf32> to vector<1x32xf32>
    %58 = arith.mulf %57, %56 : vector<1x32xf32>
    %59 = arith.mulf %40, %58 : vector<1x32xf32>
    %60 = vector.shape_cast %53 : vector<32xf32> to vector<1x32xf32>
    %61 = arith.subf %60, %59 : vector<1x32xf32>
    %62 = vector.broadcast %58 : vector<1x32xf32> to vector<8x32xf32>
    %63 = arith.mulf %36, %62 : vector<8x32xf32>
    %64 = vector.broadcast %61 : vector<1x32xf32> to vector<8x32xf32>
    %65 = arith.addf %63, %64 : vector<8x32xf32>
    %cst_21 = arith.constant 0.000000e+00 : f32
    %66 = vector.broadcast %cst_21 : f32 to vector<8x32xf32>
    %67 = arith.maximumf %65, %66 : vector<8x32xf32>
    %c0_22 = arith.constant 0 : index
    %c0_23 = arith.constant 0 : index
    %68 = vector.load %arg3[%c0_22, %c0_23] : memref<32x32xf32, #tpu.memory_space<vmem>>, vector<32x32xf32>
    %69 = vector.extract_strided_slice %0 {offsets = [4, 0], sizes = [1, 32], strides = [1, 1]} : vector<5x32xf32> to vector<1x32xf32>
    %70 = vector.shape_cast %69 : vector<1x32xf32> to vector<32xf32>
    %cst_24 = arith.constant dense<0.000000e+00> : vector<8x32xf32>
    %71 = tpu.matmul %67, %68, %cst_24 {dimension_numbers = #tpu.dot_dimension_numbers<[1], [0], [0], [1], [0, 0, 1, 1], [], []>} : vector<8x32xf32>, vector<32x32xf32>, vector<8x32xf32> -> vector<8x32xf32>
    %72 = vector.shape_cast %70 : vector<32xf32> to vector<1x32xf32>
    %73 = vector.broadcast %72 : vector<1x32xf32> to vector<8x32xf32>
    %74 = arith.addf %71, %73 : vector<8x32xf32>
    %c0_25 = arith.constant 0 : index
    %c0_26 = arith.constant 0 : index
    %75 = vector.load %arg5[%c0_25, %c0_26] : memref<8x32xf32, #tpu.memory_space<vmem>>, vector<8x32xf32>
    tpu.vector_store %arg5[%c0_25, %c0_26], %74 {strides = array<i32>} : memref<8x32xf32, #tpu.memory_space<vmem>>, vector<8x32xf32>,
    return
  }
}

</mosaic_0001>

<llo_original>
// kernel: custom_fully_connected.1
$region0: #{custom_fully_connected.1}
  #allocation0 [shape = 'u32[]', space=smem, size = 0x4, offset = 0x4, fixed_abs, tag = 'smem constant byte address 0x4 - core index']
  #allocation1 [shape = 'u32[72,128]{1,0:T(1,128)}', space=vmem, size = 0x9000, scoped, tag = 'internal scratch']
  %s0 = inlined_call_operand.vmem [shape: f32[8,16], index: 0, kind: input, shape index: {}]
  %s1 = inlined_call_operand.vmem [shape: f32[16,32], index: 1, kind: input, shape index: {}]
  %s2 = inlined_call_operand.hbm [shape: f32[32,32], index: 2, kind: input, shape index: {}]
  %s3 = inlined_call_operand.hbm [shape: f32[32,32], index: 3, kind: input, shape index: {}]
  %s4 = inlined_call_operand.vmem [shape: f32[5,32], index: 4, kind: input, shape index: {}]
  %s5 = inlined_call_operand.vmem [shape: f32[8,32], index: 5, kind: output, shape index: {}]
  %s6 = sld [smem:[#allocation0]]
  $region38: #{custom_fully_connected.1} parent=0
    _
  %s8 = ssub.s32 1, %s6
  %s9 = scalar_select 0, %s8, %s6
  $region1: #{custom_fully_connected.1} parent=0
    #allocation2 [shape = 'u8[16384]{0}', space=vmem, size = 0x4000, scoped, tag = 'input window, operand 2, single buffered']
    #allocation3 [shape = 's32[1]{0}', space=sflag, size = 0x4, scoped, tag = 'scoped memory for custom_fully_connected.1']
    #allocation4 [shape = 'u8[16384]{0}', space=vmem, size = 0x4000, scoped, tag = 'input window, operand 3, single buffered']
    #allocation5 [shape = 's32[1]{0}', space=sflag, size = 0x4, scoped, tag = 'scoped memory for custom_fully_connected.1']
    %10 = vsyncpa [#allocation3], 0
    %11 = vsyncpa [#allocation5], 0
    // Predicated region
    $region2: #{custom_fully_connected.1} parent=1 // pred_check
      _
    $region3: #{custom_fully_connected.1} parent=1 // pred_check_branch
      %13 = sbr.rel (0) target = $region5
    $region4: #{custom_fully_connected.1} parent=1 // pred_region
      _
    $region5: #{custom_fully_connected.1} parent=1 // pred_fallthru
      _
    // Predicated region
    $region6: #{custom_fully_connected.1} parent=1 // pred_check
      _
    $region7: #{custom_fully_connected.1} parent=1 // pred_check_branch
      %15 = sbr.rel (0) target = $region9
    $region8: #{custom_fully_connected.1} parent=1 // pred_region
      _
    $region9: #{custom_fully_connected.1} parent=1 // pred_fallthru
      _
    // Predicated region
    $region10: #{custom_fully_connected.1} parent=1 // pred_check
      _
    $region11: #{custom_fully_connected.1} parent=1 // pred_check_branch
      %17 = sbr.rel (0) target = $region13
    $region12: #{custom_fully_connected.1} parent=1 // pred_region
      %19 = vsyncadd [#allocation3], 0
      %s20 = sshll.u32 %s2, 4
      %s21 = int_to_ptr.hbm [resolvable:$true] %s20
      %s22 = sshll.u32 [#allocation2], 4
      %s23 = int_to_ptr.vmem [resolvable:$true] %s22
      %28 = dma.hbm_to_vmem [thread:$0]  %s21, 512, %s23, [#allocation3], 128, 128, 8
    $region13: #{custom_fully_connected.1} parent=1 // pred_fallthru
      _
    // Predicated region
    $region14: #{custom_fully_connected.1} parent=1 // pred_check
      _
    $region15: #{custom_fully_connected.1} parent=1 // pred_check_branch
      %30 = sbr.rel (0) target = $region17
    $region16: #{custom_fully_connected.1} parent=1 // pred_region
      %32 = vsyncadd [#allocation5], 0
      %s33 = sshll.u32 %s3, 4
      %s34 = int_to_ptr.hbm [resolvable:$true] %s33
      %s35 = sshll.u32 [#allocation4], 4
      %s36 = int_to_ptr.vmem [resolvable:$true] %s35
      %41 = dma.hbm_to_vmem [thread:$0]  %s34, 512, %s36, [#allocation5], 128, 128, 8
    $region17: #{custom_fully_connected.1} parent=1 // pred_fallthru
      _
    // Predicated region
    $region18: #{custom_fully_connected.1} parent=1 // pred_check
      _
    $region19: #{custom_fully_connected.1} parent=1 // pred_check_branch
      %43 = sbr.rel (0) target = $region21
    $region20: #{custom_fully_connected.1} parent=1 // pred_region
      _
    $region21: #{custom_fully_connected.1} parent=1 // pred_fallthru
      _
    // Predicated region
    $region22: #{custom_fully_connected.1} parent=1 // pred_check
      _
    $region23: #{custom_fully_connected.1} parent=1 // pred_check_branch
      %45 = sbr.rel (0) target = $region25
    $region24: #{custom_fully_connected.1} parent=1 // pred_region
      %47 = dma.done [#allocation3], 512
    $region25: #{custom_fully_connected.1} parent=1 // pred_fallthru
      _
    // Predicated region
    $region26: #{custom_fully_connected.1} parent=1 // pred_check
      _
    $region27: #{custom_fully_connected.1} parent=1 // pred_check_branch
      %49 = sbr.rel (0) target = $region29
    $region28: #{custom_fully_connected.1} parent=1 // pred_region
      %51 = dma.done [#allocation5], 512
    $region29: #{custom_fully_connected.1} parent=1 // pred_fallthru
      _
    %v52 = vld [vmem:[%s4] sm:$0x1f]
    %v53 = vld [vmem:[%s0] sm:$0xff]
    %v54 = vld [vmem:[%s1] sm:$0xff]
    %v55 = vld [vmem:[%s1 + $0x8] sm:$0xff]
    %vm56 = vcmask 130048
    %v58 = vsel %vm56, %v53, 0
    %60 = vmatpush.msra.mxu0 0.0
    %61 = vmatpush.msra.mxu0 0.0
    %62 = vmatpush.msra.mxu0 0.0
    %63 = vmatpush.msra.mxu0 0.0
    %64 = vmatpush.msra.mxu0 0.0
    %65 = vmatpush.msra.mxu0 0.0
    %66 = vmatpush.msra.mxu0 0.0
    %67 = vmatpush.msra.mxu0 0.0
    %68 = vmatpush.msra.mxu0 0.0
    %69 = vmatpush.msra.mxu0 0.0
    %70 = vmatpush.msra.mxu0 0.0
    %71 = vmatpush.msra.mxu0 0.0
    %72 = vmatpush.msra.mxu0 0.0
    %73 = vmatpush.msra.mxu0 0.0
    %74 = vmatpush.msra.mxu0 %v55
    %75 = vmatpush.msra.mxu0 %v54
    %76 = vmatmul.f32.gmra.mxu0 %v58
    %v77 = vpop.f32.mrf.mxu0
    %v78 = vadd.f32 0.0, %v77
    %79 = vdwg.mxu0
    %vm80 = vcmask 261120
    %v81 = vsel %vm80, %v78, 0.0
    %v82 = vrot.slane %v81, 4
    %v83 = vadd.f32 %v81, %v82
    %v84 = vrot.slane %v83, 2
    %v85 = vadd.f32 %v83, %v84
    %v86 = vrot.slane %v85, 1
    %v87 = vadd.f32 %v85, %v86
    %v88 = vmul.f32 %v87, 0.125
    %v89 = vmul.f32 %v78, %v78
    %v90 = vsel %vm80, %v89, 0.0
    %v91 = vrot.slane %v90, 4
    %v92 = vadd.f32 %v90, %v91
    %v93 = vrot.slane %v92, 2
    %v94 = vadd.f32 %v92, %v93
    %v95 = vrot.slane %v94, 1
    %v96 = vadd.f32 %v94, %v95
    %v97 = vmul.f32 %v96, 0.125
    %v98 = vmul.f32 %v88, %v88
    %v99 = vsub.f32 %v97, %v98
    %v100 = vmax.f32 %v99, 0.0
    %v101 = vadd.f32 %v100, 1e-05
    %v102 = vrsqrt.pop %v101
    %v103 = vmul.f32 %v102, %v101
    %v104 = vmul.f32 %v103, %v102
    %v105 = vmul.f32 0.5, %v104
    %v106 = vsub.f32 1.5, %v105
    %v107 = vmul.f32 %v102, %v106
    %vm108 = vweird.f32 %v101
    %vm109 = vweird.f32 %v102
    %vm110 = vmor %vm108, %vm109
    %v111 = vsel %vm110, %v102, %v107
    %v112 = vmul.f32 %v52, %v111
    %v113 = vmul.f32 %v88, %v112
    %v115 = vrot.slane %v113, 7
    %v117 = vsub.f32 %v52, %v115
    %v118 = vperm.slane %v112, 0
    %v119 = vmul.f32 %v78, %v118
    %v120 = vperm.slane %v117, 1
    %v121 = vadd.f32 %v119, %v120
    %v122 = vmax.f32 %v121, 0.0
    %v123 = vld [vmem:[#allocation2] sm:$0xff]
    %v124 = vld [vmem:[#allocation2 + $0x8] sm:$0xff]
    %v125 = vld [vmem:[#allocation2 + $0x10] sm:$0xff]
    %v126 = vld [vmem:[#allocation2 + $0x18] sm:$0xff]
    %v128 = vsel %vm80, %v122, 0
    %130 = vmatpush.msra.mxu0 0.0
    %131 = vmatpush.msra.mxu0 0.0
    %132 = vmatpush.msra.mxu0 0.0
    %133 = vmatpush.msra.mxu0 0.0
    %134 = vmatpush.msra.mxu0 0.0
    %135 = vmatpush.msra.mxu0 0.0
    %136 = vmatpush.msra.mxu0 0.0
    %137 = vmatpush.msra.mxu0 0.0
    %138 = vmatpush.msra.mxu0 0.0
    %139 = vmatpush.msra.mxu0 0.0
    %140 = vmatpush.msra.mxu0 0.0
    %141 = vmatpush.msra.mxu0 0.0
    %142 = vmatpush.msra.mxu0 %v126
    %143 = vmatpush.msra.mxu0 %v125
    %144 = vmatpush.msra.mxu0 %v124
    %145 = vmatpush.msra.mxu0 %v123
    %146 = vmatmul.f32.gmra.mxu0 %v128
    %v147 = vpop.f32.mrf.mxu0
    %v148 = vadd.f32 0.0, %v147
    %149 = vdwg.mxu0
    %v150 = vsel %vm80, %v148, 0.0
    %v151 = vrot.slane %v150, 4
    %v152 = vadd.f32 %v150, %v151
    %v153 = vrot.slane %v152, 2
    %v154 = vadd.f32 %v152, %v153
    %v155 = vrot.slane %v154, 1
    %v156 = vadd.f32 %v154, %v155
    %v157 = vmul.f32 %v156, 0.125
    %v158 = vmul.f32 %v148, %v148
    %v159 = vsel %vm80, %v158, 0.0
    %v160 = vrot.slane %v159, 4
    %v161 = vadd.f32 %v159, %v160
    %v162 = vrot.slane %v161, 2
    %v163 = vadd.f32 %v161, %v162
    %v164 = vrot.slane %v163, 1
    %v165 = vadd.f32 %v163, %v164
    %v166 = vmul.f32 %v165, 0.125
    %v167 = vmul.f32 %v157, %v157
    %v168 = vsub.f32 %v166, %v167
    %v169 = vmax.f32 %v168, 0.0
    %v170 = vadd.f32 %v169, 1e-05
    %v171 = vrsqrt.pop %v170
    %v172 = vmul.f32 %v171, %v170
    %v173 = vmul.f32 %v172, %v171
    %v174 = vmul.f32 0.5, %v173
    %v175 = vsub.f32 1.5, %v174
    %v176 = vmul.f32 %v171, %v175
    %vm177 = vweird.f32 %v170
    %vm178 = vweird.f32 %v171
    %vm179 = vmor %vm177, %vm178
    %v180 = vsel %vm179, %v171, %v176
    %v181 = vmul.f32 %v52, %v180
    %v182 = vmul.f32 %v157, %v181
    %v184 = vrot.slane %v182, 7
    %v186 = vsub.f32 %v52, %v184
    %v187 = vperm.slane %v181, 2
    %v188 = vmul.f32 %v148, %v187
    %v189 = vperm.slane %v186, 3
    %v190 = vadd.f32 %v188, %v189
    %v191 = vmax.f32 %v190, 0.0
    %v192 = vld [vmem:[#allocation4] sm:$0xff]
    %v193 = vld [vmem:[#allocation4 + $0x8] sm:$0xff]
    %v194 = vld [vmem:[#allocation4 + $0x10] sm:$0xff]
    %v195 = vld [vmem:[#allocation4 + $0x18] sm:$0xff]
    %v196 = vperm.slane %v52, 4
    %v198 = vsel %vm80, %v191, 0
    %200 = vmatpush.msra.mxu0 0.0
    %201 = vmatpush.msra.mxu0 0.0
    %202 = vmatpush.msra.mxu0 0.0
    %203 = vmatpush.msra.mxu0 0.0
    %204 = vmatpush.msra.mxu0 0.0
    %205 = vmatpush.msra.mxu0 0.0
    %206 = vmatpush.msra.mxu0 0.0
    %207 = vmatpush.msra.mxu0 0.0
    %208 = vmatpush.msra.mxu0 0.0
    %209 = vmatpush.msra.mxu0 0.0
    %210 = vmatpush.msra.mxu0 0.0
    %211 = vmatpush.msra.mxu0 0.0
    %212 = vmatpush.msra.mxu0 %v195
    %213 = vmatpush.msra.mxu0 %v194
    %214 = vmatpush.msra.mxu0 %v193
    %215 = vmatpush.msra.mxu0 %v192
    %216 = vmatmul.f32.gmra.mxu0 %v198
    %v217 = vpop.f32.mrf.mxu0
    %v218 = vadd.f32 %v196, %v217
    %219 = vdwg.mxu0
    %220 = vst.msk [vmem:[%s5] sm:$0xff] %vm80, %v218
    // Predicated region
    $region30: #{custom_fully_connected.1} parent=1 // pred_check
      _
    $region31: #{custom_fully_connected.1} parent=1 // pred_check_branch
      %222 = sbr.rel (0) target = $region33
    $region32: #{custom_fully_connected.1} parent=1 // pred_region
      _
    $region33: #{custom_fully_connected.1} parent=1 // pred_fallthru
      _
    // Predicated region
    $region34: #{custom_fully_connected.1} parent=1 // pred_check
      _
    $region35: #{custom_fully_connected.1} parent=1 // pred_check_branch
      %224 = sbr.rel (0) target = $region37
    $region36: #{custom_fully_connected.1} parent=1 // pred_region
      _
    $region37: #{custom_fully_connected.1} parent=1 // pred_fallthru
      _
    %225 = vsyncpa [#allocation3], 1
    %226 = vsyncpa [#allocation5], 1

</llo_original>
